<compile_context>
chip_gen: v7x
topology: tpu7x:2x2x1
jax: 0.10.0
libtpu: 0.0.40
codegen_flags: <defaults>
</compile_context>

<pallas_src>
import numpy as np
import jax
import jax.numpy as jnp
from jax.experimental import pallas as pl
from jax.experimental.pallas import tpu as pltpu

T_STEPS = 30  # trajectory length (30 steps of (dx, dy))


def _build_cumsum_matrix():
    """(60, 60) f32 matrix C s.t. for an interleaved row r = (x0,y0,...,x29,y29):
       (r @ C)[t]      = sum_{s<=t} x_s   (cumulative x at time t),  t in [0,30)
       (r @ C)[30 + t] = sum_{s<=t} y_s   (cumulative y at time t)
    Built once on the host; DMA'd into VMEM once and kept resident."""
    c = np.zeros((2 * T_STEPS, 2 * T_STEPS), dtype=np.float32)
    for t in range(T_STEPS):
        c[0:2 * (t + 1):2, t] = 1.0                 # even input lanes -> cum x(t)
        c[1:2 * (t + 1):2, T_STEPS + t] = 1.0       # odd  input lanes -> cum y(t)
    return c


_C_MAT = jnp.asarray(_build_cumsum_matrix())


def _drivable_area_loss_kernel(c_ref, pred_ref, gt_ref, mask_ref, out_ref):
    """One grid step = one block of BLK trajectories.

    c_ref    : (60, 60)  f32  -- fused cumsum / de-interleave matrix (resident)
    pred_ref : (BLK, 60) f32  -- native interleaved step deltas
    gt_ref   : (BLK, 60) f32
    mask_ref : (BLK, 60) f32  -- outside-DA mask repeated per coordinate [m | m]
    out_ref  : (8, 128)  f32  -- lane-dense slab; partial loss sum broadcast
    """
    # cumsum is linear: cumsum(pred) - cumsum(gt) == cumsum(pred - gt)
    diff = pred_ref[...] - gt_ref[...]                                 # (BLK, 60)
    # single MXU matmul: columns [0:30] = cumulative dx, [30:60] = cumulative dy
    cum = jnp.dot(diff, c_ref[...], preferred_element_type=jnp.float32)  # (BLK, 60)

    m = mask_ref[...]                                                  # (BLK, 60)
    cnt = jnp.sum(m, axis=1, keepdims=True)                            # (BLK, 1)
    # per-row 1 / num_masked_elements (EUP); rows with cnt==0 have m==0 everywhere
    # so they contribute exactly 0 (matches the reference `continue` branch).
    inv = pl.reciprocal(jnp.maximum(cnt, 1.0), approx=False)           # (BLK, 1)

    scaled = (m * inv) * (cum * cum)                                   # (BLK, 60)
    partial = jnp.sum(scaled, keepdims=True)                           # (1, 1)
    out_ref[...] = jnp.broadcast_to(partial, out_ref.shape)


def _round_up(x, m):
    return ((x + m - 1) // m) * m


def drivable_area_loss(pred_trajs, gt_trajs, outside_da_masks, *, blk=None):
    """pred_trajs, gt_trajs: (B, 60) step deltas (x/y interleaved per step).
    outside_da_masks: (B, 30) bool/float, truthy where the cumulative point is
    outside the drivable area.  Returns scalar f32 loss."""
    B = pred_trajs.shape[0]
    pred = pred_trajs.reshape(B, 2 * T_STEPS).astype(jnp.float32)
    gt = gt_trajs.reshape(B, 2 * T_STEPS).astype(jnp.float32)
    m = outside_da_masks.reshape(B, T_STEPS).astype(jnp.float32)
    mask60 = jnp.concatenate([m, m], axis=1)            # (B, 60): [m | m]

    MAX_BLK = 4096
    if blk is None:
        if B <= MAX_BLK:
            blk = B                                     # single full-array block
        else:
            # >= 2 blocks so the parallel grid axis shards across both v7x TCs
            nblk_t = max(2, -(-B // MAX_BLK))
            blk = _round_up(-(-B // nblk_t), 8)

    if blk >= B:
        # Small-B fast path: full-array block, no padding, single grid step.
        blk = B
        nblk = 1
    else:
        blk = _round_up(blk, 8)
        b_pad = _round_up(B, blk)
        nblk = b_pad // blk
        pad = b_pad - B
        if pad:
            # padded rows have all-zero masks -> contribute exactly 0
            pred = jnp.pad(pred, ((0, pad), (0, 0)))
            gt = jnp.pad(gt, ((0, pad), (0, 0)))
            mask60 = jnp.pad(mask60, ((0, pad), (0, 0)))

    out = pl.pallas_call(
        _drivable_area_loss_kernel,
        out_shape=jax.ShapeDtypeStruct((nblk * 8, 128), jnp.float32),
        grid=(nblk,),
        in_specs=[
            pl.BlockSpec((2 * T_STEPS, 2 * T_STEPS), lambda i: (0, 0)),  # C, resident
            pl.BlockSpec((blk, 2 * T_STEPS), lambda i: (i, 0)),
            pl.BlockSpec((blk, 2 * T_STEPS), lambda i: (i, 0)),
            pl.BlockSpec((blk, 2 * T_STEPS), lambda i: (i, 0)),
        ],
        out_specs=pl.BlockSpec((8, 128), lambda i: (i, 0)),
        compiler_params=pltpu.CompilerParams(
            dimension_semantics=("parallel",),
            vmem_limit_bytes=32 * 1024 * 1024),
    )(_C_MAT, pred, gt, mask60)

    if nblk == 1:
        total = out[0, 0]
    else:
        total = jnp.sum(out[0::8, 0])       # one partial loss sum per grid block
    return total / jnp.float32(B)


def _reference(pred_trajs, gt_trajs, outside_da_masks):
    pred = np.asarray(pred_trajs, np.float32)
    gt = np.asarray(gt_trajs, np.float32)
    masks = np.asarray(outside_da_masks)
    B = pred.shape[0]
    total = 0.0
    for i in range(B):
        mm = masks[i].astype(bool)
        if not np.any(mm):
            continue
        p = pred[i].reshape(T_STEPS, 2).cumsum(axis=0)
        g = gt[i].reshape(T_STEPS, 2).cumsum(axis=0)
        d = p[mm] - g[mm]
        total += float(np.mean(d * d))
    return total / B


if __name__ == "__main__":
    key = jax.random.PRNGKey(0)
    k1, k2, k3 = jax.random.split(key, 3)

    # Primary case: num_graphs = 2, matching the module's tiny batch
    # (exercises the small-B fast path: full-array block, no pad, out[0, 0]).
    B = 2
    pred_trajs = jax.random.normal(k1, (B, T_STEPS * 2), dtype=jnp.float32)
    gt_trajs = jax.random.normal(k2, (B, T_STEPS * 2), dtype=jnp.float32)
    # synthetic outside-drivable-area masks (stand-in for da_helper output);
    # trajectory 0 has some points outside, trajectory 1 has none
    # (exercises the `if not np.any(mask): continue` branch).
    mask0 = jax.random.bernoulli(k3, 0.4, (T_STEPS,))
    mask1 = jnp.zeros((T_STEPS,), dtype=bool)
    outside_da_masks = jnp.stack([mask0, mask1], axis=0)

    loss = drivable_area_loss(pred_trajs, gt_trajs, outside_da_masks)
    loss = jax.block_until_ready(loss)
    ref = _reference(pred_trajs, gt_trajs, outside_da_masks)
    assert np.allclose(float(loss), ref, rtol=1e-4, atol=1e-6), (float(loss), ref)

    # Second case: forces the multi-block "parallel" grid + batch padding path.
    k4, k5, k6 = jax.random.split(jax.random.PRNGKey(1), 3)
    B2 = 20
    pred2 = jax.random.normal(k4, (B2, T_STEPS * 2), dtype=jnp.float32)
    gt2 = jax.random.normal(k5, (B2, T_STEPS * 2), dtype=jnp.float32)
    masks2 = jax.random.bernoulli(k6, 0.3, (B2, T_STEPS))
    loss2 = jax.block_until_ready(drivable_area_loss(pred2, gt2, masks2, blk=8))
    ref2 = _reference(pred2, gt2, masks2)
    assert np.allclose(float(loss2), ref2, rtol=1e-4, atol=1e-6), (float(loss2), ref2)

    # Third case: default block selection on a batch that is not a multiple of 8
    # (single full-array block, no padding).
    loss3 = jax.block_until_ready(drivable_area_loss(pred2, gt2, masks2))
    assert np.allclose(float(loss3), ref2, rtol=1e-4, atol=1e-6), (float(loss3), ref2)

    print("KERNEL_OK")
</pallas_src>

<mosaic_0001>
module attributes {stable_mosaic.version = 11 : i64} {
  func.func @_drivable_area_loss_kernel(%arg0: i32, %arg1: memref<60x60xf32, #tpu.memory_space<vmem>>, %arg2: memref<2x60xf32, #tpu.memory_space<vmem>>, %arg3: memref<2x60xf32, #tpu.memory_space<vmem>>, %arg4: memref<2x60xf32, #tpu.memory_space<vmem>>, %arg5: memref<8x128xf32, #tpu.memory_space<vmem>>) attributes {dimension_semantics = [#tpu.dimension_semantics<parallel>], iteration_bounds = array<i64: 1>, scalar_prefetch = 0 : i64, scratch_operands = 0 : i64, tpu.core_type = #tpu.core_type<tc>, window_params = [{pipeline_mode = #tpu.pipeline_mode<synchronous>, transform_indices = @transform_0, window_bounds = array<i64: 60, 60>}, {transform_indices = @transform_1, window_bounds = array<i64: 2, 60>}, {transform_indices = @transform_2, window_bounds = array<i64: 2, 60>}, {transform_indices = @transform_3, window_bounds = array<i64: 2, 60>}, {transform_indices = @transform_4, window_bounds = array<i64: 8, 128>}]} {
    %c0 = arith.constant 0 : index
    %c0_0 = arith.constant 0 : index
    %0 = vector.load %arg2[%c0, %c0_0] : memref<2x60xf32, #tpu.memory_space<vmem>>, vector<2x60xf32>
    %c0_1 = arith.constant 0 : index
    %c0_2 = arith.constant 0 : index
    %1 = vector.load %arg3[%c0_1, %c0_2] : memref<2x60xf32, #tpu.memory_space<vmem>>, vector<2x60xf32>
    %2 = arith.subf %0, %1 : vector<2x60xf32>
    %c0_3 = arith.constant 0 : index
    %c0_4 = arith.constant 0 : index
    %3 = vector.load %arg1[%c0_3, %c0_4] : memref<60x60xf32, #tpu.memory_space<vmem>>, vector<60x60xf32>
    %cst = arith.constant dense<0.000000e+00> : vector<2x60xf32>
    %4 = tpu.matmul %2, %3, %cst {dimension_numbers = #tpu.dot_dimension_numbers<[1], [0], [0], [1], [0, 0, 1, 1], [], []>} : vector<2x60xf32>, vector<60x60xf32>, vector<2x60xf32> -> vector<2x60xf32>
    %c0_5 = arith.constant 0 : index
    %c0_6 = arith.constant 0 : index
    %5 = vector.load %arg4[%c0_5, %c0_6] : memref<2x60xf32, #tpu.memory_space<vmem>>, vector<2x60xf32>
    %cst_7 = arith.constant dense<0.000000e+00> : vector<2xf32>
    %6 = vector.multi_reduction <add>, %5, %cst_7 [1] : vector<2x60xf32> to vector<2xf32>
    %7 = vector.shape_cast %6 : vector<2xf32> to vector<2x1xf32>
    %cst_8 = arith.constant 1.000000e+00 : f32
    %8 = vector.broadcast %cst_8 : f32 to vector<2x1xf32>
    %9 = arith.maximumf %7, %8 : vector<2x1xf32>
    %10 = tpu.reciprocal %9 : vector<2x1xf32> -> vector<2x1xf32>
    %11 = vector.broadcast %10 : vector<2x1xf32> to vector<2x60xf32>
    %12 = arith.mulf %5, %11 : vector<2x60xf32>
    %13 = arith.mulf %4, %4 : vector<2x60xf32>
    %14 = arith.mulf %12, %13 : vector<2x60xf32>
    %15 = vector.shape_cast %14 : vector<2x60xf32> to vector<1x2x60xf32>
    %cst_9 = arith.constant dense<0.000000e+00> : vector<1xf32>
    %16 = vector.multi_reduction <add>, %15, %cst_9 [1, 2] : vector<1x2x60xf32> to vector<1xf32>
    %17 = vector.shape_cast %16 : vector<1xf32> to vector<1x1x1xf32>
    %18 = vector.extract %17[0, 0, 0] : f32 from vector<1x1x1xf32>
    %19 = vector.broadcast %18 : f32 to vector<1x1xf32>
    %20 = vector.shape_cast %19 : vector<1x1xf32> to vector<1x1xf32>
    %21 = vector.broadcast %20 : vector<1x1xf32> to vector<8x128xf32>
    %c0_10 = arith.constant 0 : index
    %c0_11 = arith.constant 0 : index
    %22 = vector.load %arg5[%c0_10, %c0_11] : memref<8x128xf32, #tpu.memory_space<vmem>>, vector<8x128xf32>
    tpu.vector_store %arg5[%c0_10, %c0_11], %21 {strides = array<i32>} : memref<8x128xf32, #tpu.memory_space<vmem>>, vector<8x128xf32>,
    return
  }
  func.func @transform_0(%arg0: i32) -> (i32, i32) {
    %c0_i32 = arith.constant 0 : i32
    %c0_i32_0 = arith.constant 0 : i32
    %c0_i32_1 = arith.constant 0 : i32
    return %c0_i32, %c0_i32_0 : i32, i32
  }
  func.func @transform_1(%arg0: i32) -> (i32, i32) {
    %c0_i32 = arith.constant 0 : i32
    %c0_i32_0 = arith.constant 0 : i32
    return %arg0, %c0_i32 : i32, i32
  }
  func.func @transform_2(%arg0: i32) -> (i32, i32) {
    %c0_i32 = arith.constant 0 : i32
    %c0_i32_0 = arith.constant 0 : i32
    return %arg0, %c0_i32 : i32, i32
  }
  func.func @transform_3(%arg0: i32) -> (i32, i32) {
    %c0_i32 = arith.constant 0 : i32
    %c0_i32_0 = arith.constant 0 : i32
    return %arg0, %c0_i32 : i32, i32
  }
  func.func @transform_4(%arg0: i32) -> (i32, i32) {
    %c0_i32 = arith.constant 0 : i32
    %c0_i32_0 = arith.constant 0 : i32
    return %arg0, %c0_i32 : i32, i32
  }
}

</mosaic_0001>

<llo_original>
// kernel: tpu_custom_call.1
$region0: #{tpu_custom_call.1}
  #allocation0 [shape = 'u32[]', space=smem, size = 0x4, offset = 0x4, fixed_abs, tag = 'smem constant byte address 0x4 - core index']
  #allocation1 [shape = 'u32[144,128]{1,0:T(1,128)}', space=vmem, size = 0x12000, scoped, tag = 'internal scratch']
  %s0 = inlined_call_operand.hbm [shape: f32[60,60], index: 0, kind: input, shape index: {}]
  %s1 = inlined_call_operand.vmem [shape: f32[2,60], index: 1, kind: input, shape index: {}]
  %s2 = inlined_call_operand.vmem [shape: f32[2,60], index: 2, kind: input, shape index: {}]
  %s3 = inlined_call_operand.vmem [shape: f32[2,60], index: 3, kind: input, shape index: {}]
  %s4 = inlined_call_operand.hbm [shape: f32[8,128], index: 4, kind: output, shape index: {}]
  %s5 = sld [smem:[#allocation0]]
  $region30: #{tpu_custom_call.1} parent=0
    _
  %s7 = ssub.s32 1, %s5
  %s8 = scalar_select 0, %s7, %s5
  $region1: #{tpu_custom_call.1} parent=0
    #allocation2 [shape = 'u8[32768]{0}', space=vmem, size = 0x8000, scoped, tag = 'input window, operand 0, single buffered']
    #allocation3 [shape = 's32[1]{0}', space=sflag, size = 0x4, scoped, tag = 'scoped memory for tpu_custom_call.1']
    #allocation4 [shape = 's32[1]{0}', space=sflag, size = 0x4, scoped, tag = 'scoped memory for tpu_custom_call.1']
    #allocation5 [shape = 'u8[4096]{0}', space=vmem, size = 0x1000, scoped, tag = 'output window, operand 0, single buffered']
    %9 = vsyncpa [#allocation3], 0
    %10 = vsyncpa [#allocation4], 0
    // Predicated region
    $region2: #{tpu_custom_call.1} parent=1 // pred_check
      _
    $region3: #{tpu_custom_call.1} parent=1 // pred_check_branch
      %12 = sbr.rel (0) target = $region5
    $region4: #{tpu_custom_call.1} parent=1 // pred_region
      %s14 = ssub.s32 1024, 1024
      %15 = vsyncadd [#allocation3], %s14
      %s16 = sshll.u32 [#allocation2], 4
      %s17 = int_to_ptr.vmem [resolvable:$true] %s16
      %22 = dma.hbm_to_vmem [thread:$0]  %s0, 1024, %s17, [#allocation3], 128, 128, 8
    $region5: #{tpu_custom_call.1} parent=1 // pred_fallthru
      _
    // Predicated region
    $region6: #{tpu_custom_call.1} parent=1 // pred_check
      _
    $region7: #{tpu_custom_call.1} parent=1 // pred_check_branch
      %24 = sbr.rel (0) target = $region9
    $region8: #{tpu_custom_call.1} parent=1 // pred_region
      _
    $region9: #{tpu_custom_call.1} parent=1 // pred_fallthru
      _
    // Predicated region
    $region10: #{tpu_custom_call.1} parent=1 // pred_check
      _
    $region11: #{tpu_custom_call.1} parent=1 // pred_check_branch
      %26 = sbr.rel (0) target = $region13
    $region12: #{tpu_custom_call.1} parent=1 // pred_region
      _
    $region13: #{tpu_custom_call.1} parent=1 // pred_fallthru
      _
    // Predicated region
    $region14: #{tpu_custom_call.1} parent=1 // pred_check
      _
    $region15: #{tpu_custom_call.1} parent=1 // pred_check_branch
      %28 = sbr.rel (0) target = $region17
    $region16: #{tpu_custom_call.1} parent=1 // pred_region
      _
    $region17: #{tpu_custom_call.1} parent=1 // pred_fallthru
      _
    // Predicated region
    $region18: #{tpu_custom_call.1} parent=1 // pred_check
      _
    $region19: #{tpu_custom_call.1} parent=1 // pred_check_branch
      %30 = sbr.rel (0) target = $region21
    $region20: #{tpu_custom_call.1} parent=1 // pred_region
      %31 = dma.done [#allocation3], 1024
    $region21: #{tpu_custom_call.1} parent=1 // pred_fallthru
      _
    %v32 = vld [vmem:[%s1] sm:$0x3]
    %v33 = vld [vmem:[%s2] sm:$0x3]
    %v34 = vsub.f32 %v32, %v33
    %v35 = vld [vmem:[#allocation2] sm:$0xff]
    %v36 = vld [vmem:[#allocation2 + $0x8] sm:$0xff]
    %v37 = vld [vmem:[#allocation2 + $0x10] sm:$0xff]
    %v38 = vld [vmem:[#allocation2 + $0x18] sm:$0xff]
    %v39 = vld [vmem:[#allocation2 + $0x20] sm:$0xff]
    %v40 = vld [vmem:[#allocation2 + $0x28] sm:$0xff]
    %v41 = vld [vmem:[#allocation2 + $0x30] sm:$0xff]
    %v42 = vld [vmem:[#allocation2 + $0x38] sm:$0xf]
    %vm43 = vcmask 490496
    %v45 = vsel %vm43, %v34, 0
    %vm47 = vcmask 1043456
    %v49 = vsel %vm47, %v42, 0
    %51 = vmatprep.subr.mxu0 0.0
    %52 = vmatpush1.msra.mxu0 %v35
    %53 = vmatprep.subr.mxu0 0.0
    %54 = vmatpush1.msra.mxu0 %v36
    %55 = vmatprep.subr.mxu0 0.0
    %56 = vmatpush1.msra.mxu0 %v37
    %57 = vmatprep.subr.mxu0 0.0
    %58 = vmatpush1.msra.mxu0 %v38
    %59 = vmatprep.subr.mxu0 0.0
    %60 = vmatpush1.msra.mxu0 %v39
    %61 = vmatprep.subr.mxu0 0.0
    %62 = vmatpush1.msra.mxu0 %v40
    %63 = vmatprep.subr.mxu0 0.0
    %64 = vmatpush1.msra.mxu0 %v41
    %65 = vmatprep.subr.mxu0 0.0
    %66 = vmatpush1.msra.mxu0 %v49
    %67 = vmatprep.subr.mxu0 0.0
    %68 = vmatpush1.msra.mxu0 0.0
    %69 = vmatprep.subr.mxu0 0.0
    %70 = vmatpush1.msra.mxu0 0.0
    %71 = vmatprep.subr.mxu0 0.0
    %72 = vmatpush1.msra.mxu0 0.0
    %73 = vmatprep.subr.mxu0 0.0
    %74 = vmatpush1.msra.mxu0 0.0
    %75 = vmatprep.subr.mxu0 0.0
    %76 = vmatpush1.msra.mxu0 0.0
    %77 = vmatprep.subr.mxu0 0.0
    %78 = vmatpush1.msra.mxu0 0.0
    %79 = vmatprep.subr.mxu0 0.0
    %80 = vmatpush1.msra.mxu0 0.0
    %81 = vmatprep.subr.mxu0 0.0
    %82 = vmatpush1.msra.mxu0 0.0
    %83 = vmatprep.subr.mxu0 0.0
    %84 = vmatpush1.msra.mxu0 0.0
    %85 = vmatprep.subr.mxu0 0.0
    %86 = vmatpush1.msra.mxu0 0.0
    %87 = vmatprep.subr.mxu0 0.0
    %88 = vmatpush1.msra.mxu0 0.0
    %89 = vmatprep.subr.mxu0 0.0
    %90 = vmatpush1.msra.mxu0 0.0
    %91 = vmatprep.subr.mxu0 0.0
    %92 = vmatpush1.msra.mxu0 0.0
    %93 = vmatprep.subr.mxu0 0.0
    %94 = vmatpush1.msra.mxu0 0.0
    %95 = vmatprep.subr.mxu0 0.0
    %96 = vmatpush1.msra.mxu0 0.0
    %97 = vmatprep.subr.mxu0 0.0
    %98 = vmatpush1.msra.mxu0 0.0
    %99 = vmatprep.subr.mxu0 0.0
    %100 = vmatpush1.msra.mxu0 0.0
    %101 = vmatprep.subr.mxu0 0.0
    %102 = vmatpush1.msra.mxu0 0.0
    %103 = vmatprep.subr.mxu0 0.0
    %104 = vmatpush1.msra.mxu0 0.0
    %105 = vmatprep.subr.mxu0 0.0
    %106 = vmatpush1.msra.mxu0 0.0
    %107 = vmatprep.subr.mxu0 0.0
    %108 = vmatpush1.msra.mxu0 0.0
    %109 = vmatprep.subr.mxu0 0.0
    %110 = vmatpush1.msra.mxu0 0.0
    %111 = vmatprep.subr.mxu0 0.0
    %112 = vmatpush1.msra.mxu0 0.0
    %113 = vmatprep.subr.mxu0 0.0
    %114 = vmatpush1.msra.mxu0 0.0
    %115 = vmatprep.mubr.f32.mxu0 0.0
    %116 = vmatmul.mubr.f32.gmra.mrb[0].mxu0 %v45
    %v117 = vpop.f32.mrb[0].mxu0
    %v118 = vadd.f32 0.0, %v117
    %v119 = vpop.f32.mrb[0].mxu0
    %120 = vdwg.mxu0
    %v121 = vld [vmem:[%s3] sm:$0x3]
    %vm122 = vcmask 484352
    %v123 = vsel %vm122, %v121, 0.0
    %124 = vadd.xlane.f32.xlu0 %v123
    %v125 = vpop.xlane.xlu0 %124
    %v126 = vmax.f32 %v125, 1.0
    %v127 = vrcp.pop %v126
    %v128 = vmul.f32 %v121, %v127
    %v129 = vmul.f32 %v118, %v118
    %v130 = vmul.f32 %v128, %v129
    %v131 = vsel %vm122, %v130, 0.0
    %132 = vadd.xlane.f32.xlu0 %v131
    %v133 = vpop.xlane.xlu0 %132
    %v134 = vrot.slane %v133, 4
    %v135 = vadd.f32 %v133, %v134
    %v136 = vrot.slane %v135, 2
    %v137 = vadd.f32 %v135, %v136
    %v138 = vrot.slane %v137, 1
    %v139 = vadd.f32 %v137, %v138
    %s140 = vtos %v139
    %v141 = vstv %s140
    %142 = vst [vmem:[#allocation5] sm:$0xff] %v141
    // Predicated region
    $region22: #{tpu_custom_call.1} parent=1 // pred_check
      _
    $region23: #{tpu_custom_call.1} parent=1 // pred_check_branch
      %144 = sbr.rel (0) target = $region25
    $region24: #{tpu_custom_call.1} parent=1 // pred_region
      %s146 = ssub.s32 128, 128
      %147 = vsyncadd [#allocation4], %s146
      %s149 = sshll.u32 [#allocation5], 4
      %s150 = int_to_ptr.vmem [resolvable:$true] %s149
      %152 = dma.vmem_to_hbm [thread:$0]  %s150, 128, %s4, [#allocation4]
    $region25: #{tpu_custom_call.1} parent=1 // pred_fallthru
      _
    // Predicated region
    $region26: #{tpu_custom_call.1} parent=1 // pred_check
      _
    $region27: #{tpu_custom_call.1} parent=1 // pred_check_branch
      %154 = sbr.rel (0) target = $region29
    $region28: #{tpu_custom_call.1} parent=1 // pred_region
      %155 = dma.done [#allocation4], 128
    $region29: #{tpu_custom_call.1} parent=1 // pred_fallthru
      _
    %156 = vsyncpa [#allocation3], 1
    %157 = vsyncpa [#allocation4], 1

</llo_original>
